<compile_context>
chip_gen: v5e
topology: v5e:2x2
jax: 0.10.0
libtpu: 0.0.40
codegen_flags: <defaults>
</compile_context>

<pallas_src>
from math import floor

import jax
import jax.numpy as jnp
import numpy as np
from jax.experimental import pallas as pl
from jax.experimental.pallas import tpu as pltpu

# ---------------- model config (shapes implied by the module) ----------------
SEQ_LENGTH = 8          # seqLength
SEQ_FEATURE_NUM = 4     # seqFeatureNum
SALIENCY_WIDTH = 4
SALIENCY_NUM = 2
N_OUTPUT = 2
DROPOUT_RATE = 0.5      # eval mode -> identity

SEQ_SIZE = SEQ_LENGTH * SEQ_FEATURE_NUM                         # 32
SALIENCY_SIZE = SALIENCY_WIDTH * SALIENCY_WIDTH * SALIENCY_NUM  # 32
INPUT_SIZE = SEQ_SIZE + SALIENCY_SIZE                           # 64
CONV_OUT = 128          # seqCNN1D_outChannels
CONV_K = 2              # seqCNN1D_kernelSize
POOL = 2                # seqCNN1D_poolingRate
CONV_T = SEQ_LENGTH - CONV_K + 1                                # 7
POOL_T = floor(CONV_T / POOL)                                   # 3
SEQ_CNN_OUT = POOL_T * CONV_OUT                                 # 384
SAL_FC_OUT = 64
PRD_IN = SAL_FC_OUT + SEQ_CNN_OUT                               # 448
PRD_H1 = 128
PRD_H2 = 128
BN_EPS = 1e-5

LANE = 128
KF = CONV_K * SEQ_FEATURE_NUM                                   # 8 (rows per conv position)
FUSED_OUT = SEQ_CNN_OUT + LANE                                  # 512 = pooled(384) | sal(128 padded)
ALIGN = 16                                                      # bf16 sublane packing


# ------------------------------- kernel --------------------------------------
def _dgaze_kernel(x_ref, wA_ref, wB_ref, sh0_ref,
                  w1_ref, sh1_ref, w2_ref, sh2_ref, w3_ref, b3_ref,
                  out_ref):
    f32 = jnp.float32
    bf16 = jnp.bfloat16

    x = x_ref[...]                                                   # (TB, 64) bf16

    # Stage 1: Conv1d(k=2)+BN+ReLU+MaxPool fused with SaliencyFC+BN+ReLU.
    #   a = even conv positions | saliency,  b = odd conv positions | saliency.
    #   relu(max(a, b) + shift) == max(relu(a + shift), relu(b + shift))
    #   because ReLU is monotone and the shift is identical for both halves;
    #   the saliency block is duplicated in wA/wB so max(a, a) == a there.
    a = jnp.dot(x, wA_ref[...], preferred_element_type=f32)          # (TB, 512)
    b = jnp.dot(x, wB_ref[...], preferred_element_type=f32)          # (TB, 512)
    act = jnp.maximum(jnp.maximum(a, b) + sh0_ref[...], 0.0)         # (TB, 512) f32

    # Stage 2: PrdFC layer 1 (BN3 + bias folded), single K=512 dot.
    h1 = jnp.dot(act.astype(bf16), w1_ref[...], preferred_element_type=f32)
    h1 = jnp.maximum(h1 + sh1_ref[...], 0.0)                         # (TB, 128)

    # Stage 3: PrdFC layer 2 (BN4 + bias folded).
    h2 = jnp.dot(h1.astype(bf16), w2_ref[...], preferred_element_type=f32)
    h2 = jnp.maximum(h2 + sh2_ref[...], 0.0)                         # (TB, 128)

    # Stage 4: output Linear, lane-padded to 128 so the store is unmasked.
    out = jnp.dot(h2.astype(bf16), w3_ref[...], preferred_element_type=f32) + b3_ref[...]
    out_ref[...] = out.astype(out_ref.dtype)


# ------------------------------- wrapper --------------------------------------
def _round_up(n, m):
    return ((n + m - 1) // m) * m


def _cdiv(a, b):
    return -(-a // b)


def dgaze_forward(x, kp, *, block_b=1024):
    """x: (B, 64) float32 -> (B, 2) float32 (eval-mode forward)."""
    B = x.shape[0]
    Ba = _round_up(B, ALIGN)
    tb = min(_round_up(block_b, ALIGN), Ba)
    # >= 2 grid steps when the batch allows so both v7x TensorCores get work.
    if Ba >= 2 * ALIGN:
        tb = min(tb, _round_up(_cdiv(Ba, 2), ALIGN))
    tb = max(tb, ALIGN)
    Bp = _round_up(B, tb)

    xb = x.astype(jnp.bfloat16)
    if Bp != B:
        xb = jnp.pad(xb, ((0, Bp - B), (0, 0)))

    weights = (kp['wA'], kp['wB'], kp['sh0'],
               kp['w1'], kp['sh1'], kp['w2'], kp['sh2'], kp['w3'], kp['b3'])

    in_specs = [pl.BlockSpec((tb, INPUT_SIZE), lambda i: (i, 0))]
    in_specs += [pl.BlockSpec(w.shape, lambda i: (0, 0)) for w in weights]

    out = pl.pallas_call(
        _dgaze_kernel,
        out_shape=jax.ShapeDtypeStruct((Bp, LANE), jnp.bfloat16),
        grid=(Bp // tb,),
        in_specs=in_specs,
        out_specs=pl.BlockSpec((tb, LANE), lambda i: (i, 0)),
        compiler_params=pltpu.CompilerParams(
            dimension_semantics=("parallel",),
            vmem_limit_bytes=48 * 1024 * 1024),
    )(xb, *weights)

    return out[:B, :N_OUTPUT].astype(jnp.float32)


# --------------------------- parameter setup ----------------------------------
def _bn_params(key, n):
    k1, k2, k3, k4 = jax.random.split(key, 4)
    gamma = jax.random.uniform(k1, (n,), jnp.float32, 0.5, 1.5)
    beta = jax.random.uniform(k2, (n,), jnp.float32, -0.1, 0.1)
    mean = jax.random.uniform(k3, (n,), jnp.float32, -0.1, 0.1)
    var = jax.random.uniform(k4, (n,), jnp.float32, 0.5, 1.5)
    return gamma, beta, mean, var


def _fold_bn(bn):
    gamma, beta, mean, var = bn
    scale = gamma / jnp.sqrt(var + BN_EPS)
    shift = beta - mean * scale
    return scale.reshape(1, -1), shift.reshape(1, -1)


def init_params(key):
    ks = jax.random.split(key, 14)
    u = lambda k, s, sc: jax.random.uniform(k, s, jnp.float32, -sc, sc)
    raw = dict(
        w_conv=u(ks[0], (CONV_OUT, SEQ_FEATURE_NUM, CONV_K), 0.3),  # torch Conv1d (O,F,K)
        b_conv=u(ks[1], (CONV_OUT,), 0.1),
        bn1=_bn_params(ks[2], CONV_OUT),
        w_sal=u(ks[3], (SAL_FC_OUT, SALIENCY_SIZE), 0.2),           # torch Linear (out,in)
        b_sal=u(ks[4], (SAL_FC_OUT,), 0.1),
        bn2=_bn_params(ks[5], SAL_FC_OUT),
        w1=u(ks[6], (PRD_H1, PRD_IN), 0.1),
        b1=u(ks[7], (PRD_H1,), 0.1),
        bn3=_bn_params(ks[8], PRD_H1),
        w2=u(ks[9], (PRD_H2, PRD_H1), 0.1),
        b2=u(ks[10], (PRD_H2,), 0.1),
        bn4=_bn_params(ks[11], PRD_H2),
        w3=u(ks[12], (N_OUTPUT, PRD_H2), 0.1),
        b3=u(ks[13], (N_OUTPUT,), 0.1),
    )

    s1, sh1 = _fold_bn(raw['bn1'])   # (1,128)
    s2, sh2 = _fold_bn(raw['bn2'])   # (1,64)
    s3, sh3 = _fold_bn(raw['bn3'])   # (1,128)
    s4, sh4 = _fold_bn(raw['bn4'])   # (1,128)

    # Conv weight as (k*F, O) with BN1 scale folded in; conv bias*scale+shift.
    wc_small = raw['w_conv'].transpose(2, 1, 0).reshape(KF, CONV_OUT) * s1   # (8,128), row = k*4+f
    conv_shift = raw['b_conv'].reshape(1, -1) * s1 + sh1                     # (1,128)

    # Saliency FC folded (BN2), zero-padded 64 -> 128 output lanes.
    wsal = raw['w_sal'].T * s2                                               # (32,64)
    wsal_p = jnp.zeros((SALIENCY_SIZE, LANE), jnp.float32).at[:, :SAL_FC_OUT].set(wsal)
    sal_shift = raw['b_sal'].reshape(1, -1) * s2 + sh2
    sal_shift_p = jnp.zeros((1, LANE), jnp.float32).at[:, :SAL_FC_OUT].set(sal_shift)

    # Banded fused stage-1 weights (consume raw x directly; no im2col):
    #   wA: even conv positions 0,2,4 in cols 0..383, saliency in cols 384..511
    #   wB: odd  conv positions 1,3,5 in cols 0..383, saliency in cols 384..511
    # Conv position t uses input rows 4t .. 4t+7 (time t and t+1, 4 features).
    wA = jnp.zeros((INPUT_SIZE, FUSED_OUT), jnp.float32)
    wB = jnp.zeros((INPUT_SIZE, FUSED_OUT), jnp.float32)
    for s in range(POOL_T):                       # pooled position s
        te, to = 2 * s, 2 * s + 1                 # even / odd conv positions
        wA = wA.at[SEQ_FEATURE_NUM * te: SEQ_FEATURE_NUM * te + KF,
                   s * CONV_OUT:(s + 1) * CONV_OUT].set(wc_small)
        wB = wB.at[SEQ_FEATURE_NUM * to: SEQ_FEATURE_NUM * to + KF,
                   s * CONV_OUT:(s + 1) * CONV_OUT].set(wc_small)
    wA = wA.at[SEQ_SIZE:, SEQ_CNN_OUT:].set(wsal_p)   # saliency block (replicated
    wB = wB.at[SEQ_SIZE:, SEQ_CNN_OUT:].set(wsal_p)   # in both so max(a,a)==a)
    sh0 = jnp.concatenate([jnp.tile(conv_shift, (1, POOL_T)), sal_shift_p], axis=1)  # (1,512)

    # PrdFC layer 1: torch seqOut flat index is o*POOL_T + q (channel-major);
    # the kernel's pooled layout is q*128 + o, so permute the seq rows.
    w1_t = raw['w1'].T                                                        # (448,128)
    w1seq = w1_t[:SEQ_CNN_OUT].reshape(CONV_OUT, POOL_T, PRD_H1)
    w1seq = w1seq.transpose(1, 0, 2).reshape(SEQ_CNN_OUT, PRD_H1)             # rows q*128+o
    w1sal = jnp.zeros((LANE, PRD_H1), jnp.float32).at[:SAL_FC_OUT].set(w1_t[SEQ_CNN_OUT:])
    w1f = jnp.concatenate([w1seq, w1sal], axis=0) * s3                        # (512,128)
    sh1f = raw['b1'].reshape(1, -1) * s3 + sh3

    # PrdFC layer 2 folded.
    w2f = raw['w2'].T * s4                                                    # (128,128)
    sh2f = raw['b2'].reshape(1, -1) * s4 + sh4

    # Output Linear, lane-padded 2 -> 128 columns.
    w3p = jnp.zeros((PRD_H2, LANE), jnp.float32).at[:, :N_OUTPUT].set(raw['w3'].T)
    b3p = jnp.zeros((1, LANE), jnp.float32).at[:, :N_OUTPUT].set(raw['b3'].reshape(1, -1))

    bf = jnp.bfloat16
    kernel_params = dict(
        wA=wA.astype(bf), wB=wB.astype(bf), sh0=sh0,
        w1=w1f.astype(bf), sh1=sh1f,
        w2=w2f.astype(bf), sh2=sh2f,
        w3=w3p.astype(bf), b3=b3p,
    )
    return raw, kernel_params


# --------------------------- pure-JAX reference --------------------------------
def _bn_apply(x, bn, axis):
    gamma, beta, mean, var = bn
    shp = [1] * x.ndim
    shp[axis] = -1
    return (x - mean.reshape(shp)) / jnp.sqrt(var.reshape(shp) + BN_EPS) * \
        gamma.reshape(shp) + beta.reshape(shp)


def reference_forward(x, raw):
    B = x.shape[0]
    head = x[:, :SEQ_SIZE].reshape(B, SEQ_LENGTH, SEQ_FEATURE_NUM).transpose(0, 2, 1)  # (B,F,L)
    conv = sum(jnp.einsum('bft,of->bot', head[:, :, k:k + CONV_T], raw['w_conv'][:, :, k])
               for k in range(CONV_K)) + raw['b_conv'][None, :, None]                   # (B,O,T)
    conv = jnp.maximum(_bn_apply(conv, raw['bn1'], axis=1), 0.0)
    pooled = conv[:, :, :POOL_T * POOL].reshape(B, CONV_OUT, POOL_T, POOL).max(-1)
    seq_out = pooled.reshape(B, SEQ_CNN_OUT)
    sal = x[:, SEQ_SIZE:]
    sal_out = jnp.maximum(_bn_apply(sal @ raw['w_sal'].T + raw['b_sal'], raw['bn2'], 1), 0.0)
    prd = jnp.concatenate([seq_out, sal_out], axis=1)
    h1 = jnp.maximum(_bn_apply(prd @ raw['w1'].T + raw['b1'], raw['bn3'], 1), 0.0)
    h2 = jnp.maximum(_bn_apply(h1 @ raw['w2'].T + raw['b2'], raw['bn4'], 1), 0.0)
    return h2 @ raw['w3'].T + raw['b3']


# --------------------------------- main ----------------------------------------
if __name__ == "__main__":
    key = jax.random.PRNGKey(0)
    kx, kpk = jax.random.split(key)
    raw, kernel_params = init_params(kpk)

    # single-block, multi-block with ragged batch (padding path), and many-step grid
    for B, bb in ((8, 1024), (200, 1024), (64, 16)):
        x = jax.random.uniform(jax.random.fold_in(kx, B),
                               (B, INPUT_SIZE), jnp.float32, -1.0, 1.0)
        out = jax.block_until_ready(dgaze_forward(x, kernel_params, block_b=bb))
        ref = reference_forward(x, raw)
        # bf16 MXU operands -> looser (inference-appropriate) tolerance.
        np.testing.assert_allclose(np.asarray(out), np.asarray(ref), rtol=4e-2, atol=4e-2)

    print("KERNEL_OK")
</pallas_src>

<mosaic_0001>
module attributes {stable_mosaic.version = 11 : i64} {
  func.func @_dgaze_kernel(%arg0: i32, %arg1: memref<16x64xbf16, #tpu.memory_space<vmem>>, %arg2: memref<64x512xbf16, #tpu.memory_space<vmem>>, %arg3: memref<64x512xbf16, #tpu.memory_space<vmem>>, %arg4: memref<1x512xf32, #tpu.memory_space<vmem>>, %arg5: memref<512x128xbf16, #tpu.memory_space<vmem>>, %arg6: memref<1x128xf32, #tpu.memory_space<vmem>>, %arg7: memref<128x128xbf16, #tpu.memory_space<vmem>>, %arg8: memref<1x128xf32, #tpu.memory_space<vmem>>, %arg9: memref<128x128xbf16, #tpu.memory_space<vmem>>, %arg10: memref<1x128xf32, #tpu.memory_space<vmem>>, %arg11: memref<16x128xbf16, #tpu.memory_space<vmem>>) attributes {dimension_semantics = [#tpu.dimension_semantics<parallel>], iteration_bounds = array<i64: 1>, scalar_prefetch = 0 : i64, scratch_operands = 0 : i64, tpu.core_type = #tpu.core_type<tc>, window_params = [{transform_indices = @transform_0, window_bounds = array<i64: 16, 64>}, {pipeline_mode = #tpu.pipeline_mode<synchronous>, transform_indices = @transform_1, window_bounds = array<i64: 64, 512>}, {pipeline_mode = #tpu.pipeline_mode<synchronous>, transform_indices = @transform_2, window_bounds = array<i64: 64, 512>}, {pipeline_mode = #tpu.pipeline_mode<synchronous>, transform_indices = @transform_3, window_bounds = array<i64: 1, 512>}, {pipeline_mode = #tpu.pipeline_mode<synchronous>, transform_indices = @transform_4, window_bounds = array<i64: 512, 128>}, {pipeline_mode = #tpu.pipeline_mode<synchronous>, transform_indices = @transform_5, window_bounds = array<i64: 1, 128>}, {pipeline_mode = #tpu.pipeline_mode<synchronous>, transform_indices = @transform_6, window_bounds = array<i64: 128, 128>}, {pipeline_mode = #tpu.pipeline_mode<synchronous>, transform_indices = @transform_7, window_bounds = array<i64: 1, 128>}, {pipeline_mode = #tpu.pipeline_mode<synchronous>, transform_indices = @transform_8, window_bounds = array<i64: 128, 128>}, {pipeline_mode = #tpu.pipeline_mode<synchronous>, transform_indices = @transform_9, window_bounds = array<i64: 1, 128>}, {transform_indices = @transform_10, window_bounds = array<i64: 16, 128>}]} {
    %c0 = arith.constant 0 : index
    %c0_0 = arith.constant 0 : index
    %0 = vector.load %arg1[%c0, %c0_0] : memref<16x64xbf16, #tpu.memory_space<vmem>>, vector<16x64xbf16>
    %c0_1 = arith.constant 0 : index
    %c0_2 = arith.constant 0 : index
    %1 = vector.load %arg2[%c0_1, %c0_2] : memref<64x512xbf16, #tpu.memory_space<vmem>>, vector<64x512xbf16>
    %cst = arith.constant dense<0.000000e+00> : vector<16x512xf32>
    %2 = tpu.matmul %0, %1, %cst {dimension_numbers = #tpu.dot_dimension_numbers<[1], [0], [0], [1], [0, 0, 1, 1], [], []>} : vector<16x64xbf16>, vector<64x512xbf16>, vector<16x512xf32> -> vector<16x512xf32>
    %c0_3 = arith.constant 0 : index
    %c0_4 = arith.constant 0 : index
    %3 = vector.load %arg3[%c0_3, %c0_4] : memref<64x512xbf16, #tpu.memory_space<vmem>>, vector<64x512xbf16>
    %cst_5 = arith.constant dense<0.000000e+00> : vector<16x512xf32>
    %4 = tpu.matmul %0, %3, %cst_5 {dimension_numbers = #tpu.dot_dimension_numbers<[1], [0], [0], [1], [0, 0, 1, 1], [], []>} : vector<16x64xbf16>, vector<64x512xbf16>, vector<16x512xf32> -> vector<16x512xf32>
    %5 = arith.maximumf %2, %4 : vector<16x512xf32>
    %c0_6 = arith.constant 0 : index
    %c0_7 = arith.constant 0 : index
    %6 = vector.load %arg4[%c0_6, %c0_7] : memref<1x512xf32, #tpu.memory_space<vmem>>, vector<1x512xf32>
    %7 = vector.broadcast %6 : vector<1x512xf32> to vector<16x512xf32>
    %8 = arith.addf %5, %7 : vector<16x512xf32>
    %cst_8 = arith.constant 0.000000e+00 : f32
    %9 = vector.broadcast %cst_8 : f32 to vector<16x512xf32>
    %10 = arith.maximumf %8, %9 : vector<16x512xf32>
    %11 = arith.truncf %10 : vector<16x512xf32> to vector<16x512xbf16>
    %c0_9 = arith.constant 0 : index
    %c0_10 = arith.constant 0 : index
    %12 = vector.load %arg5[%c0_9, %c0_10] : memref<512x128xbf16, #tpu.memory_space<vmem>>, vector<512x128xbf16>
    %cst_11 = arith.constant dense<0.000000e+00> : vector<16x128xf32>
    %13 = tpu.matmul %11, %12, %cst_11 {dimension_numbers = #tpu.dot_dimension_numbers<[1], [0], [0], [1], [0, 0, 1, 1], [], []>} : vector<16x512xbf16>, vector<512x128xbf16>, vector<16x128xf32> -> vector<16x128xf32>
    %c0_12 = arith.constant 0 : index
    %c0_13 = arith.constant 0 : index
    %14 = vector.load %arg6[%c0_12, %c0_13] : memref<1x128xf32, #tpu.memory_space<vmem>>, vector<1x128xf32>
    %15 = vector.broadcast %14 : vector<1x128xf32> to vector<16x128xf32>
    %16 = arith.addf %13, %15 : vector<16x128xf32>
    %cst_14 = arith.constant 0.000000e+00 : f32
    %17 = vector.broadcast %cst_14 : f32 to vector<16x128xf32>
    %18 = arith.maximumf %16, %17 : vector<16x128xf32>
    %19 = arith.truncf %18 : vector<16x128xf32> to vector<16x128xbf16>
    %c0_15 = arith.constant 0 : index
    %c0_16 = arith.constant 0 : index
    %20 = vector.load %arg7[%c0_15, %c0_16] : memref<128x128xbf16, #tpu.memory_space<vmem>>, vector<128x128xbf16>
    %cst_17 = arith.constant dense<0.000000e+00> : vector<16x128xf32>
    %21 = tpu.matmul %19, %20, %cst_17 {dimension_numbers = #tpu.dot_dimension_numbers<[1], [0], [0], [1], [0, 0, 1, 1], [], []>} : vector<16x128xbf16>, vector<128x128xbf16>, vector<16x128xf32> -> vector<16x128xf32>
    %c0_18 = arith.constant 0 : index
    %c0_19 = arith.constant 0 : index
    %22 = vector.load %arg8[%c0_18, %c0_19] : memref<1x128xf32, #tpu.memory_space<vmem>>, vector<1x128xf32>
    %23 = vector.broadcast %22 : vector<1x128xf32> to vector<16x128xf32>
    %24 = arith.addf %21, %23 : vector<16x128xf32>
    %cst_20 = arith.constant 0.000000e+00 : f32
    %25 = vector.broadcast %cst_20 : f32 to vector<16x128xf32>
    %26 = arith.maximumf %24, %25 : vector<16x128xf32>
    %27 = arith.truncf %26 : vector<16x128xf32> to vector<16x128xbf16>
    %c0_21 = arith.constant 0 : index
    %c0_22 = arith.constant 0 : index
    %28 = vector.load %arg9[%c0_21, %c0_22] : memref<128x128xbf16, #tpu.memory_space<vmem>>, vector<128x128xbf16>
    %cst_23 = arith.constant dense<0.000000e+00> : vector<16x128xf32>
    %29 = tpu.matmul %27, %28, %cst_23 {dimension_numbers = #tpu.dot_dimension_numbers<[1], [0], [0], [1], [0, 0, 1, 1], [], []>} : vector<16x128xbf16>, vector<128x128xbf16>, vector<16x128xf32> -> vector<16x128xf32>
    %c0_24 = arith.constant 0 : index
    %c0_25 = arith.constant 0 : index
    %30 = vector.load %arg10[%c0_24, %c0_25] : memref<1x128xf32, #tpu.memory_space<vmem>>, vector<1x128xf32>
    %31 = vector.broadcast %30 : vector<1x128xf32> to vector<16x128xf32>
    %32 = arith.addf %29, %31 : vector<16x128xf32>
    %33 = arith.truncf %32 : vector<16x128xf32> to vector<16x128xbf16>
    %c0_26 = arith.constant 0 : index
    %c0_27 = arith.constant 0 : index
    %34 = vector.load %arg11[%c0_26, %c0_27] : memref<16x128xbf16, #tpu.memory_space<vmem>>, vector<16x128xbf16>
    tpu.vector_store %arg11[%c0_26, %c0_27], %33 {strides = array<i32>} : memref<16x128xbf16, #tpu.memory_space<vmem>>, vector<16x128xbf16>,
    return
  }
  func.func @transform_0(%arg0: i32) -> (i32, i32) {
    %c0_i32 = arith.constant 0 : i32
    %c0_i32_0 = arith.constant 0 : i32
    return %arg0, %c0_i32 : i32, i32
  }
  func.func @transform_1(%arg0: i32) -> (i32, i32) {
    %c0_i32 = arith.constant 0 : i32
    %c0_i32_0 = arith.constant 0 : i32
    %c0_i32_1 = arith.constant 0 : i32
    return %c0_i32, %c0_i32_0 : i32, i32
  }
  func.func @transform_2(%arg0: i32) -> (i32, i32) {
    %c0_i32 = arith.constant 0 : i32
    %c0_i32_0 = arith.constant 0 : i32
    %c0_i32_1 = arith.constant 0 : i32
    return %c0_i32, %c0_i32_0 : i32, i32
  }
  func.func @transform_3(%arg0: i32) -> (i32, i32) {
    %c0_i32 = arith.constant 0 : i32
    %c0_i32_0 = arith.constant 0 : i32
    %c0_i32_1 = arith.constant 0 : i32
    return %c0_i32, %c0_i32_0 : i32, i32
  }
  func.func @transform_4(%arg0: i32) -> (i32, i32) {
    %c0_i32 = arith.constant 0 : i32
    %c0_i32_0 = arith.constant 0 : i32
    %c0_i32_1 = arith.constant 0 : i32
    return %c0_i32, %c0_i32_0 : i32, i32
  }
  func.func @transform_5(%arg0: i32) -> (i32, i32) {
    %c0_i32 = arith.constant 0 : i32
    %c0_i32_0 = arith.constant 0 : i32
    %c0_i32_1 = arith.constant 0 : i32
    return %c0_i32, %c0_i32_0 : i32, i32
  }
  func.func @transform_6(%arg0: i32) -> (i32, i32) {
    %c0_i32 = arith.constant 0 : i32
    %c0_i32_0 = arith.constant 0 : i32
    %c0_i32_1 = arith.constant 0 : i32
    return %c0_i32, %c0_i32_0 : i32, i32
  }
  func.func @transform_7(%arg0: i32) -> (i32, i32) {
    %c0_i32 = arith.constant 0 : i32
    %c0_i32_0 = arith.constant 0 : i32
    %c0_i32_1 = arith.constant 0 : i32
    return %c0_i32, %c0_i32_0 : i32, i32
  }
  func.func @transform_8(%arg0: i32) -> (i32, i32) {
    %c0_i32 = arith.constant 0 : i32
    %c0_i32_0 = arith.constant 0 : i32
    %c0_i32_1 = arith.constant 0 : i32
    return %c0_i32, %c0_i32_0 : i32, i32
  }
  func.func @transform_9(%arg0: i32) -> (i32, i32) {
    %c0_i32 = arith.constant 0 : i32
    %c0_i32_0 = arith.constant 0 : i32
    %c0_i32_1 = arith.constant 0 : i32
    return %c0_i32, %c0_i32_0 : i32, i32
  }
  func.func @transform_10(%arg0: i32) -> (i32, i32) {
    %c0_i32 = arith.constant 0 : i32
    %c0_i32_0 = arith.constant 0 : i32
    return %arg0, %c0_i32 : i32, i32
  }
}

</mosaic_0001>

<llo_original>
// kernel: tpu_custom_call.1
$region0: #{tpu_custom_call.1}
  #allocation0 [shape = 'u32[]', space=smem, size = 0x4, offset = 0x4, fixed_abs, tag = 'smem constant byte address 0x4 - core index']
  #allocation1 [shape = 'u32[72,128]{1,0:T(1,128)}', space=vmem, size = 0x9000, scoped, tag = 'internal scratch']
  %s0 = inlined_call_operand.hbm [shape: bf16[16,64], index: 0, kind: input, shape index: {}]
  %s1 = inlined_call_operand.hbm [shape: bf16[64,512], index: 1, kind: input, shape index: {}]
  %s2 = inlined_call_operand.hbm [shape: bf16[64,512], index: 2, kind: input, shape index: {}]
  %s3 = inlined_call_operand.hbm [shape: f32[1,512], index: 3, kind: input, shape index: {}]
  %s4 = inlined_call_operand.hbm [shape: bf16[512,128], index: 4, kind: input, shape index: {}]
  %s5 = inlined_call_operand.vmem [shape: f32[1,128], index: 5, kind: input, shape index: {}]
  %s6 = inlined_call_operand.hbm [shape: bf16[128,128], index: 6, kind: input, shape index: {}]
  %s7 = inlined_call_operand.vmem [shape: f32[1,128], index: 7, kind: input, shape index: {}]
  %s8 = inlined_call_operand.hbm [shape: bf16[128,128], index: 8, kind: input, shape index: {}]
  %s9 = inlined_call_operand.vmem [shape: f32[1,128], index: 9, kind: input, shape index: {}]
  %s10 = inlined_call_operand.hbm [shape: bf16[16,128], index: 10, kind: output, shape index: {}]
  %s11 = sld [smem:[#allocation0]]
  $region78: #{tpu_custom_call.1} parent=0
    _
  %s13 = ssub.s32 1, %s11
  %s14 = scalar_select 0, %s13, %s11
  $region1: #{tpu_custom_call.1} parent=0
    #allocation2 [shape = 'u8[4096]{0}', space=vmem, size = 0x1000, scoped, tag = 'input window, operand 0, single buffered']
    #allocation3 [shape = 's32[1]{0}', space=sflag, size = 0x4, scoped, tag = 'scoped memory for tpu_custom_call.1']
    #allocation4 [shape = 's32[1]{0}', space=sflag, size = 0x4, scoped, tag = 'scoped memory for tpu_custom_call.1']
    #allocation5 [shape = 'u8[65536]{0}', space=vmem, size = 0x10000, scoped, tag = 'input window, operand 1, single buffered']
    #allocation6 [shape = 's32[1]{0}', space=sflag, size = 0x4, scoped, tag = 'scoped memory for tpu_custom_call.1']
    #allocation7 [shape = 'u8[65536]{0}', space=vmem, size = 0x10000, scoped, tag = 'input window, operand 2, single buffered']
    #allocation8 [shape = 'u8[2048]{0}', space=vmem, size = 0x800, scoped, tag = 'input window, operand 3, single buffered']
    #allocation9 [shape = 's32[1]{0}', space=sflag, size = 0x4, scoped, tag = 'scoped memory for tpu_custom_call.1']
    #allocation10 [shape = 'u8[131072]{0}', space=vmem, size = 0x20000, scoped, tag = 'input window, operand 4, single buffered']
    #allocation11 [shape = 'u8[32768]{0}', space=vmem, size = 0x8000, scoped, tag = 'input window, operand 6, single buffered']
    #allocation12 [shape = 's32[1]{0}', space=sflag, size = 0x4, scoped, tag = 'scoped memory for tpu_custom_call.1']
    #allocation13 [shape = 'u8[32768]{0}', space=vmem, size = 0x8000, scoped, tag = 'input window, operand 8, single buffered']
    #allocation14 [shape = 'u8[4096]{0}', space=vmem, size = 0x1000, scoped, tag = 'output window, operand 0, single buffered']
    %15 = vsyncpa [#allocation3], 0
    %16 = vsyncpa [#allocation6], 0
    %17 = vsyncpa [#allocation9], 0
    %18 = vsyncpa [#allocation12], 0
    %19 = vsyncpa [#allocation4], 0
    // Predicated region
    $region2: #{tpu_custom_call.1} parent=1 // pred_check
      _
    $region3: #{tpu_custom_call.1} parent=1 // pred_check_branch
      %21 = sbr.rel (0) target = $region5
    $region4: #{tpu_custom_call.1} parent=1 // pred_region
      %23 = vsyncadd [#allocation3], 0
      %s24 = sshll.u32 %s0, 4
      %s25 = int_to_ptr.hbm [resolvable:$true] %s24
      %s26 = sshll.u32 [#allocation2], 4
      %s27 = int_to_ptr.vmem [resolvable:$true] %s26
      %32 = dma.hbm_to_vmem [thread:$0]  %s25, 128, %s27, [#allocation3], 64, 64, 4
    $region5: #{tpu_custom_call.1} parent=1 // pred_fallthru
      _
    // Predicated region
    $region6: #{tpu_custom_call.1} parent=1 // pred_check
      _
    $region7: #{tpu_custom_call.1} parent=1 // pred_check_branch
      %34 = sbr.rel (0) target = $region9
    $region8: #{tpu_custom_call.1} parent=1 // pred_region
      %36 = vsyncadd [#allocation6], 0
      %s37 = sshll.u32 %s1, 4
      %s38 = int_to_ptr.hbm [resolvable:$true] %s37
      %s39 = sshll.u32 [#allocation5], 4
      %s40 = int_to_ptr.vmem [resolvable:$true] %s39
      %45 = dma.hbm_to_vmem [thread:$0]  %s38, 2048, %s40, [#allocation6], 256, 256, 16
    $region9: #{tpu_custom_call.1} parent=1 // pred_fallthru
      _
    // Predicated region
    $region10: #{tpu_custom_call.1} parent=1 // pred_check
      _
    $region11: #{tpu_custom_call.1} parent=1 // pred_check_branch
      %47 = sbr.rel (0) target = $region13
    $region12: #{tpu_custom_call.1} parent=1 // pred_region
      %49 = vsyncadd [#allocation6], 0
      %s50 = sshll.u32 %s2, 4
      %s51 = int_to_ptr.hbm [resolvable:$true] %s50
      %s52 = sshll.u32 [#allocation7], 4
      %s53 = int_to_ptr.vmem [resolvable:$true] %s52
      %58 = dma.hbm_to_vmem [thread:$0]  %s51, 2048, %s53, [#allocation6], 256, 256, 16
    $region13: #{tpu_custom_call.1} parent=1 // pred_fallthru
      _
    // Predicated region
    $region14: #{tpu_custom_call.1} parent=1 // pred_check
      _
    $region15: #{tpu_custom_call.1} parent=1 // pred_check_branch
      %60 = sbr.rel (0) target = $region17
    $region16: #{tpu_custom_call.1} parent=1 // pred_region
      %62 = vsyncadd [#allocation9], 0
      %s64 = sshll.u32 %s3, 4
      %s65 = int_to_ptr.hbm [resolvable:$true] %s64
      %s66 = sshll.u32 [#allocation8], 4
      %s67 = int_to_ptr.vmem [resolvable:$true] %s66
      %69 = dma.hbm_to_vmem [thread:$0]  %s65, 64, %s67, [#allocation9]
    $region17: #{tpu_custom_call.1} parent=1 // pred_fallthru
      _
    // Predicated region
    $region18: #{tpu_custom_call.1} parent=1 // pred_check
      _
    $region19: #{tpu_custom_call.1} parent=1 // pred_check_branch
      %71 = sbr.rel (0) target = $region21
    $region20: #{tpu_custom_call.1} parent=1 // pred_region
      %73 = vsyncadd [#allocation9], 0
      %s74 = sshll.u32 %s4, 4
      %s75 = int_to_ptr.hbm [resolvable:$true] %s74
      %s76 = sshll.u32 [#allocation10], 4
      %s77 = int_to_ptr.vmem [resolvable:$true] %s76
      %82 = dma.hbm_to_vmem [thread:$0]  %s75, 4096, %s77, [#allocation9], 64, 64, 4
    $region21: #{tpu_custom_call.1} parent=1 // pred_fallthru
      _
    // Predicated region
    $region22: #{tpu_custom_call.1} parent=1 // pred_check
      _
    $region23: #{tpu_custom_call.1} parent=1 // pred_check_branch
      %84 = sbr.rel (0) target = $region25
    $region24: #{tpu_custom_call.1} parent=1 // pred_region
      _
    $region25: #{tpu_custom_call.1} parent=1 // pred_fallthru
      _
    // Predicated region
    $region26: #{tpu_custom_call.1} parent=1 // pred_check
      _
    $region27: #{tpu_custom_call.1} parent=1 // pred_check_branch
      %86 = sbr.rel (0) target = $region29
    $region28: #{tpu_custom_call.1} parent=1 // pred_region
      %88 = vsyncadd [#allocation12], 0
      %s89 = sshll.u32 %s6, 4
      %s90 = int_to_ptr.hbm [resolvable:$true] %s89
      %s91 = sshll.u32 [#allocation11], 4
      %s92 = int_to_ptr.vmem [resolvable:$true] %s91
      %97 = dma.hbm_to_vmem [thread:$0]  %s90, 1024, %s92, [#allocation12], 64, 64, 4
    $region29: #{tpu_custom_call.1} parent=1 // pred_fallthru
      _
    // Predicated region
    $region30: #{tpu_custom_call.1} parent=1 // pred_check
      _
    $region31: #{tpu_custom_call.1} parent=1 // pred_check_branch
      %99 = sbr.rel (0) target = $region33
    $region32: #{tpu_custom_call.1} parent=1 // pred_region
      _
    $region33: #{tpu_custom_call.1} parent=1 // pred_fallthru
      _
    // Predicated region
    $region34: #{tpu_custom_call.1} parent=1 // pred_check
      _
    $region35: #{tpu_custom_call.1} parent=1 // pred_check_branch
      %101 = sbr.rel (0) target = $region37
    $region36: #{tpu_custom_call.1} parent=1 // pred_region
      %103 = vsyncadd [#allocation12], 0
      %s104 = sshll.u32 %s8, 4
      %s105 = int_to_ptr.hbm [resolvable:$true] %s104
      %s106 = sshll.u32 [#allocation13], 4
      %s107 = int_to_ptr.vmem [resolvable:$true] %s106
      %112 = dma.hbm_to_vmem [thread:$0]  %s105, 1024, %s107, [#allocation12], 64, 64, 4
    $region37: #{tpu_custom_call.1} parent=1 // pred_fallthru
      _
    // Predicated region
    $region38: #{tpu_custom_call.1} parent=1 // pred_check
      _
    $region39: #{tpu_custom_call.1} parent=1 // pred_check_branch
      %114 = sbr.rel (0) target = $region41
    $region40: #{tpu_custom_call.1} parent=1 // pred_region
      _
    $region41: #{tpu_custom_call.1} parent=1 // pred_fallthru
      _
    // Predicated region
    $region42: #{tpu_custom_call.1} parent=1 // pred_check
      _
    $region43: #{tpu_custom_call.1} parent=1 // pred_check_branch
      %116 = sbr.rel (0) target = $region45
    $region44: #{tpu_custom_call.1} parent=1 // pred_region
      %118 = dma.done [#allocation3], 128
    $region45: #{tpu_custom_call.1} parent=1 // pred_fallthru
      _
    // Predicated region
    $region46: #{tpu_custom_call.1} parent=1 // pred_check
      _
    $region47: #{tpu_custom_call.1} parent=1 // pred_check_branch
      %120 = sbr.rel (0) target = $region49
    $region48: #{tpu_custom_call.1} parent=1 // pred_region
      %122 = dma.done [#allocation6], 2048
    $region49: #{tpu_custom_call.1} parent=1 // pred_fallthru
      _
    // Predicated region
    $region50: #{tpu_custom_call.1} parent=1 // pred_check
      _
    $region51: #{tpu_custom_call.1} parent=1 // pred_check_branch
      %124 = sbr.rel (0) target = $region53
    $region52: #{tpu_custom_call.1} parent=1 // pred_region
      %126 = dma.done [#allocation6], 2048
    $region53: #{tpu_custom_call.1} parent=1 // pred_fallthru
      _
    // Predicated region
    $region54: #{tpu_custom_call.1} parent=1 // pred_check
      _
    $region55: #{tpu_custom_call.1} parent=1 // pred_check_branch
      %128 = sbr.rel (0) target = $region57
    $region56: #{tpu_custom_call.1} parent=1 // pred_region
      %130 = dma.done [#allocation9], 64
    $region57: #{tpu_custom_call.1} parent=1 // pred_fallthru
      _
    // Predicated region
    $region58: #{tpu_custom_call.1} parent=1 // pred_check
      _
    $region59: #{tpu_custom_call.1} parent=1 // pred_check_branch
      %132 = sbr.rel (0) target = $region61
    $region60: #{tpu_custom_call.1} parent=1 // pred_region
      %134 = dma.done [#allocation9], 4096
    $region61: #{tpu_custom_call.1} parent=1 // pred_fallthru
      _
    // Predicated region
    $region62: #{tpu_custom_call.1} parent=1 // pred_check
      _
    $region63: #{tpu_custom_call.1} parent=1 // pred_check_branch
      %136 = sbr.rel (0) target = $region65
    $region64: #{tpu_custom_call.1} parent=1 // pred_region
      %138 = dma.done [#allocation12], 1024
    $region65: #{tpu_custom_call.1} parent=1 // pred_fallthru
      _
    // Predicated region
    $region66: #{tpu_custom_call.1} parent=1 // pred_check
      _
    $region67: #{tpu_custom_call.1} parent=1 // pred_check_branch
      %140 = sbr.rel (0) target = $region69
    $region68: #{tpu_custom_call.1} parent=1 // pred_region
      %142 = dma.done [#allocation12], 1024
    $region69: #{tpu_custom_call.1} parent=1 // pred_fallthru
      _
    %v144 = vld [vmem:[#allocation2] sm:$0xf]
    %v145 = vld [vmem:[#allocation2 + $0x4] sm:$0xf]
    %v146 = vld [vmem:[#allocation5] sm:$0xff]
    %v147 = vld [vmem:[#allocation5 + $0x8] sm:$0xff]
    %v148 = vld [vmem:[#allocation5 + $0x10] sm:$0xff]
    %v149 = vld [vmem:[#allocation5 + $0x18] sm:$0xff]
    %v150 = vld [vmem:[#allocation5 + $0x20] sm:$0xff]
    %v151 = vld [vmem:[#allocation5 + $0x28] sm:$0xff]
    %v152 = vld [vmem:[#allocation5 + $0x30] sm:$0xff]
    %v153 = vld [vmem:[#allocation5 + $0x38] sm:$0xff]
    %v154 = vld [vmem:[#allocation5 + $0x40] sm:$0xff]
    %v155 = vld [vmem:[#allocation5 + $0x48] sm:$0xff]
    %v156 = vld [vmem:[#allocation5 + $0x50] sm:$0xff]
    %v157 = vld [vmem:[#allocation5 + $0x58] sm:$0xff]
    %v158 = vld [vmem:[#allocation5 + $0x60] sm:$0xff]
    %v159 = vld [vmem:[#allocation5 + $0x68] sm:$0xff]
    %v160 = vld [vmem:[#allocation5 + $0x70] sm:$0xff]
    %v161 = vld [vmem:[#allocation5 + $0x78] sm:$0xff]
    %v164 = vunpack.c.l.b16 %v144
    %v165 = vunpack.c.l.b16 %v145
    %v166 = vpack.c.b16 %v165, %v164
    %v183 = vunpack.c.l.b16 %v146
    %v184 = vunpack.c.h.b16 %v146
    %v185 = vunpack.c.l.b16 %v147
    %v186 = vunpack.c.h.b16 %v147
    %v187 = vunpack.c.l.b16 %v148
    %v188 = vunpack.c.h.b16 %v148
    %v189 = vunpack.c.l.b16 %v149
    %v190 = vunpack.c.h.b16 %v149
    %v191 = vunpack.c.l.b16 %v150
    %v192 = vunpack.c.h.b16 %v150
    %v193 = vunpack.c.l.b16 %v151
    %v194 = vunpack.c.h.b16 %v151
    %v195 = vunpack.c.l.b16 %v152
    %v196 = vunpack.c.h.b16 %v152
    %v197 = vunpack.c.l.b16 %v153
    %v198 = vunpack.c.h.b16 %v153
    %v199 = vunpack.c.l.b16 %v154
    %v200 = vunpack.c.h.b16 %v154
    %v201 = vunpack.c.l.b16 %v155
    %v202 = vunpack.c.h.b16 %v155
    %v203 = vunpack.c.l.b16 %v156
    %v204 = vunpack.c.h.b16 %v156
    %v205 = vunpack.c.l.b16 %v157
    %v206 = vunpack.c.h.b16 %v157
    %v207 = vunpack.c.l.b16 %v158
    %v208 = vunpack.c.h.b16 %v158
    %v209 = vunpack.c.l.b16 %v159
    %v210 = vunpack.c.h.b16 %v159
    %v211 = vunpack.c.l.b16 %v160
    %v212 = vunpack.c.h.b16 %v160
    %v213 = vunpack.c.l.b16 %v161
    %v214 = vunpack.c.h.b16 %v161
    %v215 = vpack.c.b16 %v187, %v183
    %v216 = vpack.c.b16 %v188, %v184
    %v217 = vpack.c.b16 %v189, %v185
    %v218 = vpack.c.b16 %v190, %v186
    %v219 = vpack.c.b16 %v195, %v191
    %v220 = vpack.c.b16 %v196, %v192
    %v221 = vpack.c.b16 %v197, %v193
    %v222 = vpack.c.b16 %v198, %v194
    %v223 = vpack.c.b16 %v203, %v199
    %v224 = vpack.c.b16 %v204, %v200
    %v225 = vpack.c.b16 %v205, %v201
    %v226 = vpack.c.b16 %v206, %v202
    %v227 = vpack.c.b16 %v211, %v207
    %v228 = vpack.c.b16 %v212, %v208
    %v229 = vpack.c.b16 %v213, %v209
    %v230 = vpack.c.b16 %v214, %v210
    %vm247 = vcmask 523264
    %v249 = vsel %vm247, %v166, 0
    %251 = vmatpush.bf16.msra.mxu0 0
    %252 = vmatpush.bf16.msra.mxu0 0
    %253 = vmatpush.bf16.msra.mxu0 0
    %254 = vmatpush.bf16.msra.mxu0 0
    %255 = vmatpush.bf16.msra.mxu0 %v227
    %256 = vmatpush.bf16.msra.mxu0 %v223
    %257 = vmatpush.bf16.msra.mxu0 %v219
    %258 = vmatpush.bf16.msra.mxu0 %v215
    %259 = vmatmul.bf16.gmra.mxu0 %v249
    %v260 = vpop.f32.mrf.mxu0
    %v261 = vadd.f32 0.0, %v260
    %v262 = vpop.f32.mrf.mxu0
    %v263 = vadd.f32 0.0, %v262
    %264 = vdwg.mxu0
    %265 = vmatpush.bf16.msra.mxu0 0
    %266 = vmatpush.bf16.msra.mxu0 0
    %267 = vmatpush.bf16.msra.mxu0 0
    %268 = vmatpush.bf16.msra.mxu0 0
    %269 = vmatpush.bf16.msra.mxu0 %v228
    %270 = vmatpush.bf16.msra.mxu0 %v224
    %271 = vmatpush.bf16.msra.mxu0 %v220
    %272 = vmatpush.bf16.msra.mxu0 %v216
    %273 = vmatmul.bf16.gmra.mxu0 %v249
    %v274 = vpop.f32.mrf.mxu0
    %v275 = vadd.f32 0.0, %v274
    %v276 = vpop.f32.mrf.mxu0
    %v277 = vadd.f32 0.0, %v276
    %278 = vdwg.mxu0
    %279 = vmatpush.bf16.msra.mxu0 0
    %280 = vmatpush.bf16.msra.mxu0 0
    %281 = vmatpush.bf16.msra.mxu0 0
    %282 = vmatpush.bf16.msra.mxu0 0
    %283 = vmatpush.bf16.msra.mxu0 %v229
    %284 = vmatpush.bf16.msra.mxu0 %v225
    %285 = vmatpush.bf16.msra.mxu0 %v221
    %286 = vmatpush.bf16.msra.mxu0 %v217
    %287 = vmatmul.bf16.gmra.mxu0 %v249
    %v288 = vpop.f32.mrf.mxu0
    %v289 = vadd.f32 0.0, %v288
    %v290 = vpop.f32.mrf.mxu0
    %v291 = vadd.f32 0.0, %v290
    %292 = vdwg.mxu0
    %293 = vmatpush.bf16.msra.mxu0 0
    %294 = vmatpush.bf16.msra.mxu0 0
    %295 = vmatpush.bf16.msra.mxu0 0
    %296 = vmatpush.bf16.msra.mxu0 0
    %297 = vmatpush.bf16.msra.mxu0 %v230
    %298 = vmatpush.bf16.msra.mxu0 %v226
    %299 = vmatpush.bf16.msra.mxu0 %v222
    %300 = vmatpush.bf16.msra.mxu0 %v218
    %301 = vmatmul.bf16.gmra.mxu0 %v249
    %v302 = vpop.f32.mrf.mxu0
    %v303 = vadd.f32 0.0, %v302
    %v304 = vpop.f32.mrf.mxu0
    %v305 = vadd.f32 0.0, %v304
    %306 = vdwg.mxu0
    %v307 = vld [vmem:[#allocation7] sm:$0xff]
    %v308 = vld [vmem:[#allocation7 + $0x8] sm:$0xff]
    %v309 = vld [vmem:[#allocation7 + $0x10] sm:$0xff]
    %v310 = vld [vmem:[#allocation7 + $0x18] sm:$0xff]
    %v311 = vld [vmem:[#allocation7 + $0x20] sm:$0xff]
    %v312 = vld [vmem:[#allocation7 + $0x28] sm:$0xff]
    %v313 = vld [vmem:[#allocation7 + $0x30] sm:$0xff]
    %v314 = vld [vmem:[#allocation7 + $0x38] sm:$0xff]
    %v315 = vld [vmem:[#allocation7 + $0x40] sm:$0xff]
    %v316 = vld [vmem:[#allocation7 + $0x48] sm:$0xff]
    %v317 = vld [vmem:[#allocation7 + $0x50] sm:$0xff]
    %v318 = vld [vmem:[#allocation7 + $0x58] sm:$0xff]
    %v319 = vld [vmem:[#allocation7 + $0x60] sm:$0xff]
    %v320 = vld [vmem:[#allocation7 + $0x68] sm:$0xff]
    %v321 = vld [vmem:[#allocation7 + $0x70] sm:$0xff]
    %v322 = vld [vmem:[#allocation7 + $0x78] sm:$0xff]
    %v339 = vunpack.c.l.b16 %v307
    %v340 = vunpack.c.h.b16 %v307
    %v341 = vunpack.c.l.b16 %v308
    %v342 = vunpack.c.h.b16 %v308
    %v343 = vunpack.c.l.b16 %v309
    %v344 = vunpack.c.h.b16 %v309
    %v345 = vunpack.c.l.b16 %v310
    %v346 = vunpack.c.h.b16 %v310
    %v347 = vunpack.c.l.b16 %v311
    %v348 = vunpack.c.h.b16 %v311
    %v349 = vunpack.c.l.b16 %v312
    %v350 = vunpack.c.h.b16 %v312
    %v351 = vunpack.c.l.b16 %v313
    %v352 = vunpack.c.h.b16 %v313
    %v353 = vunpack.c.l.b16 %v314
    %v354 = vunpack.c.h.b16 %v314
    %v355 = vunpack.c.l.b16 %v315
    %v356 = vunpack.c.h.b16 %v315
    %v357 = vunpack.c.l.b16 %v316
    %v358 = vunpack.c.h.b16 %v316
    %v359 = vunpack.c.l.b16 %v317
    %v360 = vunpack.c.h.b16 %v317
    %v361 = vunpack.c.l.b16 %v318
    %v362 = vunpack.c.h.b16 %v318
    %v363 = vunpack.c.l.b16 %v319
    %v364 = vunpack.c.h.b16 %v319
    %v365 = vunpack.c.l.b16 %v320
    %v366 = vunpack.c.h.b16 %v320
    %v367 = vunpack.c.l.b16 %v321
    %v368 = vunpack.c.h.b16 %v321
    %v369 = vunpack.c.l.b16 %v322
    %v370 = vunpack.c.h.b16 %v322
    %v371 = vpack.c.b16 %v343, %v339
    %v372 = vpack.c.b16 %v344, %v340
    %v373 = vpack.c.b16 %v345, %v341
    %v374 = vpack.c.b16 %v346, %v342
    %v375 = vpack.c.b16 %v351, %v347
    %v376 = vpack.c.b16 %v352, %v348
    %v377 = vpack.c.b16 %v353, %v349
    %v378 = vpack.c.b16 %v354, %v350
    %v379 = vpack.c.b16 %v359, %v355
    %v380 = vpack.c.b16 %v360, %v356
    %v381 = vpack.c.b16 %v361, %v357
    %v382 = vpack.c.b16 %v362, %v358
    %v383 = vpack.c.b16 %v367, %v363
    %v384 = vpack.c.b16 %v368, %v364
    %v385 = vpack.c.b16 %v369, %v365
    %v386 = vpack.c.b16 %v370, %v366
    %403 = vmatpush.bf16.msra.mxu0 0
    %404 = vmatpush.bf16.msra.mxu0 0
    %405 = vmatpush.bf16.msra.mxu0 0
    %406 = vmatpush.bf16.msra.mxu0 0
    %407 = vmatpush.bf16.msra.mxu0 %v383
    %408 = vmatpush.bf16.msra.mxu0 %v379
    %409 = vmatpush.bf16.msra.mxu0 %v375
    %410 = vmatpush.bf16.msra.mxu0 %v371
    %411 = vmatmul.bf16.gmra.mxu0 %v249
    %v412 = vpop.f32.mrf.mxu0
    %v413 = vadd.f32 0.0, %v412
    %v414 = vpop.f32.mrf.mxu0
    %v415 = vadd.f32 0.0, %v414
    %416 = vdwg.mxu0
    %417 = vmatpush.bf16.msra.mxu0 0
    %418 = vmatpush.bf16.msra.mxu0 0
    %419 = vmatpush.bf16.msra.mxu0 0
    %420 = vmatpush.bf16.msra.mxu0 0
    %421 = vmatpush.bf16.msra.mxu0 %v384
    %422 = vmatpush.bf16.msra.mxu0 %v380
    %423 = vmatpush.bf16.msra.mxu0 %v376
    %424 = vmatpush.bf16.msra.mxu0 %v372
    %425 = vmatmul.bf16.gmra.mxu0 %v249
    %v426 = vpop.f32.mrf.mxu0
    %v427 = vadd.f32 0.0, %v426
    %v428 = vpop.f32.mrf.mxu0
    %v429 = vadd.f32 0.0, %v428
    %430 = vdwg.mxu0
    %431 = vmatpush.bf16.msra.mxu0 0
    %432 = vmatpush.bf16.msra.mxu0 0
    %433 = vmatpush.bf16.msra.mxu0 0
    %434 = vmatpush.bf16.msra.mxu0 0
    %435 = vmatpush.bf16.msra.mxu0 %v385
    %436 = vmatpush.bf16.msra.mxu0 %v381
    %437 = vmatpush.bf16.msra.mxu0 %v377
    %438 = vmatpush.bf16.msra.mxu0 %v373
    %439 = vmatmul.bf16.gmra.mxu0 %v249
    %v440 = vpop.f32.mrf.mxu0
    %v441 = vadd.f32 0.0, %v440
    %v442 = vpop.f32.mrf.mxu0
    %v443 = vadd.f32 0.0, %v442
    %444 = vdwg.mxu0
    %445 = vmatpush.bf16.msra.mxu0 0
    %446 = vmatpush.bf16.msra.mxu0 0
    %447 = vmatpush.bf16.msra.mxu0 0
    %448 = vmatpush.bf16.msra.mxu0 0
    %449 = vmatpush.bf16.msra.mxu0 %v386
    %450 = vmatpush.bf16.msra.mxu0 %v382
    %451 = vmatpush.bf16.msra.mxu0 %v378
    %452 = vmatpush.bf16.msra.mxu0 %v374
    %453 = vmatmul.bf16.gmra.mxu0 %v249
    %v454 = vpop.f32.mrf.mxu0
    %v455 = vadd.f32 0.0, %v454
    %v456 = vpop.f32.mrf.mxu0
    %v457 = vadd.f32 0.0, %v456
    %458 = vdwg.mxu0
    %v459 = vmax.f32 %v261, %v413
    %v460 = vmax.f32 %v275, %v427
    %v461 = vmax.f32 %v289, %v441
    %v462 = vmax.f32 %v303, %v455
    %v463 = vmax.f32 %v263, %v415
    %v464 = vmax.f32 %v277, %v429
    %v465 = vmax.f32 %v291, %v443
    %v466 = vmax.f32 %v305, %v457
    %v467 = vld [vmem:[#allocation8] sm:$0xf]
    %v469 = vperm.slane %v467, 0
    %v470 = vperm.slane %v467, 1
    %v471 = vperm.slane %v467, 2
    %v472 = vperm.slane %v467, 3
    %v477 = vadd.f32 %v459, %v469
    %v478 = vadd.f32 %v460, %v470
    %v479 = vadd.f32 %v461, %v471
    %v480 = vadd.f32 %v462, %v472
    %v481 = vadd.f32 %v463, %v469
    %v482 = vadd.f32 %v464, %v470
    %v483 = vadd.f32 %v465, %v471
    %v484 = vadd.f32 %v466, %v472
    %v485 = vmax.f32 %v477, 0.0
    %v486 = vmax.f32 %v478, 0.0
    %v487 = vmax.f32 %v479, 0.0
    %v488 = vmax.f32 %v480, 0.0
    %v489 = vmax.f32 %v481, 0.0
    %v490 = vmax.f32 %v482, 0.0
    %v491 = vmax.f32 %v483, 0.0
    %v492 = vmax.f32 %v484, 0.0
    %v493 = vpack.c.bf16 %v489, %v485
    %v494 = vpack.c.bf16 %v490, %v486
    %v495 = vpack.c.bf16 %v491, %v487
    %v496 = vpack.c.bf16 %v492, %v488
    %v497 = vld [vmem:[#allocation10] sm:$0xf]
    %v498 = vld [vmem:[#allocation10 + $0x4] sm:$0xf]
    %v499 = vld [vmem:[#allocation10 + $0x8] sm:$0xf]
    %v500 = vld [vmem:[#allocation10 + $0xc] sm:$0xf]
    %v501 = vld [vmem:[#allocation10 + $0x10] sm:$0xf]
    %v502 = vld [vmem:[#allocation10 + $0x14] sm:$0xf]
    %v503 = vld [vmem:[#allocation10 + $0x18] sm:$0xf]
    %v504 = vld [vmem:[#allocation10 + $0x1c] sm:$0xf]
    %v505 = vld [vmem:[#allocation10 + $0x20] sm:$0xf]
    %v506 = vld [vmem:[#allocation10 + $0x24] sm:$0xf]
    %v507 = vld [vmem:[#allocation10 + $0x28] sm:$0xf]
    %v508 = vld [vmem:[#allocation10 + $0x2c] sm:$0xf]
    %v509 = vld [vmem:[#allocation10 + $0x30] sm:$0xf]
    %v510 = vld [vmem:[#allocation10 + $0x34] sm:$0xf]
    %v511 = vld [vmem:[#allocation10 + $0x38] sm:$0xf]
    %v512 = vld [vmem:[#allocation10 + $0x3c] sm:$0xf]
    %v513 = vld [vmem:[#allocation10 + $0x40] sm:$0xf]
    %v514 = vld [vmem:[#allocation10 + $0x44] sm:$0xf]
    %v515 = vld [vmem:[#allocation10 + $0x48] sm:$0xf]
    %v516 = vld [vmem:[#allocation10 + $0x4c] sm:$0xf]
    %v517 = vld [vmem:[#allocation10 + $0x50] sm:$0xf]
    %v518 = vld [vmem:[#allocation10 + $0x54] sm:$0xf]
    %v519 = vld [vmem:[#allocation10 + $0x58] sm:$0xf]
    %v520 = vld [vmem:[#allocation10 + $0x5c] sm:$0xf]
    %v521 = vld [vmem:[#allocation10 + $0x60] sm:$0xf]
    %v522 = vld [vmem:[#allocation10 + $0x64] sm:$0xf]
    %v523 = vld [vmem:[#allocation10 + $0x68] sm:$0xf]
    %v524 = vld [vmem:[#allocation10 + $0x6c] sm:$0xf]
    %v525 = vld [vmem:[#allocation10 + $0x70] sm:$0xf]
    %v526 = vld [vmem:[#allocation10 + $0x74] sm:$0xf]
    %v527 = vld [vmem:[#allocation10 + $0x78] sm:$0xf]
    %v528 = vld [vmem:[#allocation10 + $0x7c] sm:$0xf]
    %v529 = vld [vmem:[#allocation10 + $0x80] sm:$0xf]
    %v530 = vld [vmem:[#allocation10 + $0x84] sm:$0xf]
    %v531 = vld [vmem:[#allocation10 + $0x88] sm:$0xf]
    %v532 = vld [vmem:[#allocation10 + $0x8c] sm:$0xf]
    %v533 = vld [vmem:[#allocation10 + $0x90] sm:$0xf]
    %v534 = vld [vmem:[#allocation10 + $0x94] sm:$0xf]
    %v535 = vld [vmem:[#allocation10 + $0x98] sm:$0xf]
    %v536 = vld [vmem:[#allocation10 + $0x9c] sm:$0xf]
    %v537 = vld [vmem:[#allocation10 + $0xa0] sm:$0xf]
    %v538 = vld [vmem:[#allocation10 + $0xa4] sm:$0xf]
    %v539 = vld [vmem:[#allocation10 + $0xa8] sm:$0xf]
    %v540 = vld [vmem:[#allocation10 + $0xac] sm:$0xf]
    %v541 = vld [vmem:[#allocation10 + $0xb0] sm:$0xf]
    %v542 = vld [vmem:[#allocation10 + $0xb4] sm:$0xf]
    %v543 = vld [vmem:[#allocation10 + $0xb8] sm:$0xf]
    %v544 = vld [vmem:[#allocation10 + $0xbc] sm:$0xf]
    %v545 = vld [vmem:[#allocation10 + $0xc0] sm:$0xf]
    %v546 = vld [vmem:[#allocation10 + $0xc4] sm:$0xf]
    %v547 = vld [vmem:[#allocation10 + $0xc8] sm:$0xf]
    %v548 = vld [vmem:[#allocation10 + $0xcc] sm:$0xf]
    %v549 = vld [vmem:[#allocation10 + $0xd0] sm:$0xf]
    %v550 = vld [vmem:[#allocation10 + $0xd4] sm:$0xf]
    %v551 = vld [vmem:[#allocation10 + $0xd8] sm:$0xf]
    %v552 = vld [vmem:[#allocation10 + $0xdc] sm:$0xf]
    %v553 = vld [vmem:[#allocation10 + $0xe0] sm:$0xf]
    %v554 = vld [vmem:[#allocation10 + $0xe4] sm:$0xf]
    %v555 = vld [vmem:[#allocation10 + $0xe8] sm:$0xf]
    %v556 = vld [vmem:[#allocation10 + $0xec] sm:$0xf]
    %v557 = vld [vmem:[#allocation10 + $0xf0] sm:$0xf]
    %v558 = vld [vmem:[#allocation10 + $0xf4] sm:$0xf]
    %v559 = vld [vmem:[#allocation10 + $0xf8] sm:$0xf]
    %v560 = vld [vmem:[#allocation10 + $0xfc] sm:$0xf]
    %v561 = vld [vmem:[%s5] sm:$0x1]
    %v563 = vperm.slane %v561, 0
    %v629 = vunpack.c.l.b16 %v497
    %v630 = vunpack.c.l.b16 %v498
    %v631 = vunpack.c.l.b16 %v499
    %v632 = vunpack.c.l.b16 %v500
    %v633 = vunpack.c.l.b16 %v501
    %v634 = vunpack.c.l.b16 %v502
    %v635 = vunpack.c.l.b16 %v503
    %v636 = vunpack.c.l.b16 %v504
    %v637 = vunpack.c.l.b16 %v505
    %v638 = vunpack.c.l.b16 %v506
    %v639 = vunpack.c.l.b16 %v507
    %v640 = vunpack.c.l.b16 %v508
    %v641 = vunpack.c.l.b16 %v509
    %v642 = vunpack.c.l.b16 %v510
    %v643 = vunpack.c.l.b16 %v511
    %v644 = vunpack.c.l.b16 %v512
    %v645 = vunpack.c.l.b16 %v513
    %v646 = vunpack.c.l.b16 %v514
    %v647 = vunpack.c.l.b16 %v515
    %v648 = vunpack.c.l.b16 %v516
    %v649 = vunpack.c.l.b16 %v517
    %v650 = vunpack.c.l.b16 %v518
    %v651 = vunpack.c.l.b16 %v519
    %v652 = vunpack.c.l.b16 %v520
    %v653 = vunpack.c.l.b16 %v521
    %v654 = vunpack.c.l.b16 %v522
    %v655 = vunpack.c.l.b16 %v523
    %v656 = vunpack.c.l.b16 %v524
    %v657 = vunpack.c.l.b16 %v525
    %v658 = vunpack.c.l.b16 %v526
    %v659 = vunpack.c.l.b16 %v527
    %v660 = vunpack.c.l.b16 %v528
    %v661 = vunpack.c.l.b16 %v529
    %v662 = vunpack.c.l.b16 %v530
    %v663 = vunpack.c.l.b16 %v531
    %v664 = vunpack.c.l.b16 %v532
    %v665 = vunpack.c.l.b16 %v533
    %v666 = vunpack.c.l.b16 %v534
    %v667 = vunpack.c.l.b16 %v535
    %v668 = vunpack.c.l.b16 %v536
    %v669 = vunpack.c.l.b16 %v537
    %v670 = vunpack.c.l.b16 %v538
    %v671 = vunpack.c.l.b16 %v539
    %v672 = vunpack.c.l.b16 %v540
    %v673 = vunpack.c.l.b16 %v541
    %v674 = vunpack.c.l.b16 %v542
    %v675 = vunpack.c.l.b16 %v543
    %v676 = vunpack.c.l.b16 %v544
    %v677 = vunpack.c.l.b16 %v545
    %v678 = vunpack.c.l.b16 %v546
    %v679 = vunpack.c.l.b16 %v547
    %v680 = vunpack.c.l.b16 %v548
    %v681 = vunpack.c.l.b16 %v549
    %v682 = vunpack.c.l.b16 %v550
    %v683 = vunpack.c.l.b16 %v551
    %v684 = vunpack.c.l.b16 %v552
    %v685 = vunpack.c.l.b16 %v553
    %v686 = vunpack.c.l.b16 %v554
    %v687 = vunpack.c.l.b16 %v555
    %v688 = vunpack.c.l.b16 %v556
    %v689 = vunpack.c.l.b16 %v557
    %v690 = vunpack.c.l.b16 %v558
    %v691 = vunpack.c.l.b16 %v559
    %v692 = vunpack.c.l.b16 %v560
    %v693 = vpack.c.b16 %v630, %v629
    %v694 = vpack.c.b16 %v632, %v631
    %v695 = vpack.c.b16 %v634, %v633
    %v696 = vpack.c.b16 %v636, %v635
    %v697 = vpack.c.b16 %v638, %v637
    %v698 = vpack.c.b16 %v640, %v639
    %v699 = vpack.c.b16 %v642, %v641
    %v700 = vpack.c.b16 %v644, %v643
    %v701 = vpack.c.b16 %v646, %v645
    %v702 = vpack.c.b16 %v648, %v647
    %v703 = vpack.c.b16 %v650, %v649
    %v704 = vpack.c.b16 %v652, %v651
    %v705 = vpack.c.b16 %v654, %v653
    %v706 = vpack.c.b16 %v656, %v655
    %v707 = vpack.c.b16 %v658, %v657
    %v708 = vpack.c.b16 %v660, %v659
    %v709 = vpack.c.b16 %v662, %v661
    %v710 = vpack.c.b16 %v664, %v663
    %v711 = vpack.c.b16 %v666, %v665
    %v712 = vpack.c.b16 %v668, %v667
    %v713 = vpack.c.b16 %v670, %v669
    %v714 = vpack.c.b16 %v672, %v671
    %v715 = vpack.c.b16 %v674, %v673
    %v716 = vpack.c.b16 %v676, %v675
    %v717 = vpack.c.b16 %v678, %v677
    %v718 = vpack.c.b16 %v680, %v679
    %v719 = vpack.c.b16 %v682, %v681
    %v720 = vpack.c.b16 %v684, %v683
    %v721 = vpack.c.b16 %v686, %v685
    %v722 = vpack.c.b16 %v688, %v687
    %v723 = vpack.c.b16 %v690, %v689
    %v724 = vpack.c.b16 %v692, %v691
    %757 = vmatpush.bf16.msra.mxu0 %v700
    %758 = vmatpush.bf16.msra.mxu0 %v699
    %759 = vmatpush.bf16.msra.mxu0 %v698
    %760 = vmatpush.bf16.msra.mxu0 %v697
    %761 = vmatpush.bf16.msra.mxu0 %v696
    %762 = vmatpush.bf16.msra.mxu0 %v695
    %763 = vmatpush.bf16.msra.mxu0 %v694
    %764 = vmatpush.bf16.msra.mxu0 %v693
    %765 = vmatmul.bf16.gmra.mxu0 %v493
    %v766 = vpop.f32.mrf.mxu0
    %v767 = vadd.f32 %v563, %v766
    %v768 = vpop.f32.mrf.mxu0
    %v769 = vadd.f32 %v563, %v768
    %770 = vdwg.mxu0
    %771 = vmatpush.bf16.msra.mxu0 %v708
    %772 = vmatpush.bf16.msra.mxu0 %v707
    %773 = vmatpush.bf16.msra.mxu0 %v706
    %774 = vmatpush.bf16.msra.mxu0 %v705
    %775 = vmatpush.bf16.msra.mxu0 %v704
    %776 = vmatpush.bf16.msra.mxu0 %v703
    %777 = vmatpush.bf16.msra.mxu0 %v702
    %778 = vmatpush.bf16.msra.mxu0 %v701
    %779 = vmatmul.bf16.gmra.mxu0 %v494
    %v780 = vpop.f32.mrf.mxu0
    %v781 = vadd.f32 %v767, %v780
    %v782 = vpop.f32.mrf.mxu0
    %v783 = vadd.f32 %v769, %v782
    %784 = vdwg.mxu0
    %785 = vmatpush.bf16.msra.mxu0 %v716
    %786 = vmatpush.bf16.msra.mxu0 %v715
    %787 = vmatpush.bf16.msra.mxu0 %v714
    %788 = vmatpush.bf16.msra.mxu0 %v713
    %789 = vmatpush.bf16.msra.mxu0 %v712
    %790 = vmatpush.bf16.msra.mxu0 %v711
    %791 = vmatpush.bf16.msra.mxu0 %v710
    %792 = vmatpush.bf16.msra.mxu0 %v709
    %793 = vmatmul.bf16.gmra.mxu0 %v495
    %v794 = vpop.f32.mrf.mxu0
    %v795 = vadd.f32 %v781, %v794
    %v796 = vpop.f32.mrf.mxu0
    %v797 = vadd.f32 %v783, %v796
    %798 = vdwg.mxu0
    %799 = vmatpush.bf16.msra.mxu0 %v724
    %800 = vmatpush.bf16.msra.mxu0 %v723
    %801 = vmatpush.bf16.msra.mxu0 %v722
    %802 = vmatpush.bf16.msra.mxu0 %v721
    %803 = vmatpush.bf16.msra.mxu0 %v720
    %804 = vmatpush.bf16.msra.mxu0 %v719
    %805 = vmatpush.bf16.msra.mxu0 %v718
    %806 = vmatpush.bf16.msra.mxu0 %v717
    %807 = vmatmul.bf16.gmra.mxu0 %v496
    %v808 = vpop.f32.mrf.mxu0
    %v809 = vadd.f32 %v795, %v808
    %v810 = vpop.f32.mrf.mxu0
    %v811 = vadd.f32 %v797, %v810
    %812 = vdwg.mxu0
    %v813 = vmax.f32 %v809, 0.0
    %v814 = vmax.f32 %v811, 0.0
    %v815 = vpack.c.bf16 %v814, %v813
    %v816 = vld [vmem:[#allocation11] sm:$0xf]
    %v817 = vld [vmem:[#allocation11 + $0x4] sm:$0xf]
    %v818 = vld [vmem:[#allocation11 + $0x8] sm:$0xf]
    %v819 = vld [vmem:[#allocation11 + $0xc] sm:$0xf]
    %v820 = vld [vmem:[#allocation11 + $0x10] sm:$0xf]
    %v821 = vld [vmem:[#allocation11 + $0x14] sm:$0xf]
    %v822 = vld [vmem:[#allocation11 + $0x18] sm:$0xf]
    %v823 = vld [vmem:[#allocation11 + $0x1c] sm:$0xf]
    %v824 = vld [vmem:[#allocation11 + $0x20] sm:$0xf]
    %v825 = vld [vmem:[#allocation11 + $0x24] sm:$0xf]
    %v826 = vld [vmem:[#allocation11 + $0x28] sm:$0xf]
    %v827 = vld [vmem:[#allocation11 + $0x2c] sm:$0xf]
    %v828 = vld [vmem:[#allocation11 + $0x30] sm:$0xf]
    %v829 = vld [vmem:[#allocation11 + $0x34] sm:$0xf]
    %v830 = vld [vmem:[#allocation11 + $0x38] sm:$0xf]
    %v831 = vld [vmem:[#allocation11 + $0x3c] sm:$0xf]
    %v832 = vld [vmem:[%s7] sm:$0x1]
    %v834 = vperm.slane %v832, 0
    %v852 = vunpack.c.l.b16 %v816
    %v853 = vunpack.c.l.b16 %v817
    %v854 = vunpack.c.l.b16 %v818
    %v855 = vunpack.c.l.b16 %v819
    %v856 = vunpack.c.l.b16 %v820
    %v857 = vunpack.c.l.b16 %v821
    %v858 = vunpack.c.l.b16 %v822
    %v859 = vunpack.c.l.b16 %v823
    %v860 = vunpack.c.l.b16 %v824
    %v861 = vunpack.c.l.b16 %v825
    %v862 = vunpack.c.l.b16 %v826
    %v863 = vunpack.c.l.b16 %v827
    %v864 = vunpack.c.l.b16 %v828
    %v865 = vunpack.c.l.b16 %v829
    %v866 = vunpack.c.l.b16 %v830
    %v867 = vunpack.c.l.b16 %v831
    %v868 = vpack.c.b16 %v853, %v852
    %v869 = vpack.c.b16 %v855, %v854
    %v870 = vpack.c.b16 %v857, %v856
    %v871 = vpack.c.b16 %v859, %v858
    %v872 = vpack.c.b16 %v861, %v860
    %v873 = vpack.c.b16 %v863, %v862
    %v874 = vpack.c.b16 %v865, %v864
    %v875 = vpack.c.b16 %v867, %v866
    %884 = vmatpush.bf16.msra.mxu0 %v875
    %885 = vmatpush.bf16.msra.mxu0 %v874
    %886 = vmatpush.bf16.msra.mxu0 %v873
    %887 = vmatpush.bf16.msra.mxu0 %v872
    %888 = vmatpush.bf16.msra.mxu0 %v871
    %889 = vmatpush.bf16.msra.mxu0 %v870
    %890 = vmatpush.bf16.msra.mxu0 %v869
    %891 = vmatpush.bf16.msra.mxu0 %v868
    %892 = vmatmul.bf16.gmra.mxu0 %v815
    %v893 = vpop.f32.mrf.mxu0
    %v894 = vadd.f32 %v834, %v893
    %v895 = vpop.f32.mrf.mxu0
    %v896 = vadd.f32 %v834, %v895
    %897 = vdwg.mxu0
    %v898 = vmax.f32 %v894, 0.0
    %v899 = vmax.f32 %v896, 0.0
    %v900 = vpack.c.bf16 %v899, %v898
    %v901 = vld [vmem:[#allocation13] sm:$0xf]
    %v902 = vld [vmem:[#allocation13 + $0x4] sm:$0xf]
    %v903 = vld [vmem:[#allocation13 + $0x8] sm:$0xf]
    %v904 = vld [vmem:[#allocation13 + $0xc] sm:$0xf]
    %v905 = vld [vmem:[#allocation13 + $0x10] sm:$0xf]
    %v906 = vld [vmem:[#allocation13 + $0x14] sm:$0xf]
    %v907 = vld [vmem:[#allocation13 + $0x18] sm:$0xf]
    %v908 = vld [vmem:[#allocation13 + $0x1c] sm:$0xf]
    %v909 = vld [vmem:[#allocation13 + $0x20] sm:$0xf]
    %v910 = vld [vmem:[#allocation13 + $0x24] sm:$0xf]
    %v911 = vld [vmem:[#allocation13 + $0x28] sm:$0xf]
    %v912 = vld [vmem:[#allocation13 + $0x2c] sm:$0xf]
    %v913 = vld [vmem:[#allocation13 + $0x30] sm:$0xf]
    %v914 = vld [vmem:[#allocation13 + $0x34] sm:$0xf]
    %v915 = vld [vmem:[#allocation13 + $0x38] sm:$0xf]
    %v916 = vld [vmem:[#allocation13 + $0x3c] sm:$0xf]
    %v917 = vld [vmem:[%s9] sm:$0x1]
    %v919 = vperm.slane %v917, 0
    %v937 = vunpack.c.l.b16 %v901
    %v938 = vunpack.c.l.b16 %v902
    %v939 = vunpack.c.l.b16 %v903
    %v940 = vunpack.c.l.b16 %v904
    %v941 = vunpack.c.l.b16 %v905
    %v942 = vunpack.c.l.b16 %v906
    %v943 = vunpack.c.l.b16 %v907
    %v944 = vunpack.c.l.b16 %v908
    %v945 = vunpack.c.l.b16 %v909
    %v946 = vunpack.c.l.b16 %v910
    %v947 = vunpack.c.l.b16 %v911
    %v948 = vunpack.c.l.b16 %v912
    %v949 = vunpack.c.l.b16 %v913
    %v950 = vunpack.c.l.b16 %v914
    %v951 = vunpack.c.l.b16 %v915
    %v952 = vunpack.c.l.b16 %v916
    %v953 = vpack.c.b16 %v938, %v937
    %v954 = vpack.c.b16 %v940, %v939
    %v955 = vpack.c.b16 %v942, %v941
    %v956 = vpack.c.b16 %v944, %v943
    %v957 = vpack.c.b16 %v946, %v945
    %v958 = vpack.c.b16 %v948, %v947
    %v959 = vpack.c.b16 %v950, %v949
    %v960 = vpack.c.b16 %v952, %v951
    %969 = vmatpush.bf16.msra.mxu0 %v960
    %970 = vmatpush.bf16.msra.mxu0 %v959
    %971 = vmatpush.bf16.msra.mxu0 %v958
    %972 = vmatpush.bf16.msra.mxu0 %v957
    %973 = vmatpush.bf16.msra.mxu0 %v956
    %974 = vmatpush.bf16.msra.mxu0 %v955
    %975 = vmatpush.bf16.msra.mxu0 %v954
    %976 = vmatpush.bf16.msra.mxu0 %v953
    %977 = vmatmul.bf16.gmra.mxu0 %v900
    %v978 = vpop.f32.mrf.mxu0
    %v979 = vadd.f32 %v919, %v978
    %v980 = vpop.f32.mrf.mxu0
    %v981 = vadd.f32 %v919, %v980
    %982 = vdwg.mxu0
    %v983 = vpack.c.bf16 %v979, %v979
    %v984 = vpack.c.bf16 %v981, %v981
    %985 = vst [vmem:[#allocation14] sm:$0xf] %v983
    %986 = vst [vmem:[#allocation14 + $0x4] sm:$0xf] %v984
    // Predicated region
    $region70: #{tpu_custom_call.1} parent=1 // pred_check
      _
    $region71: #{tpu_custom_call.1} parent=1 // pred_check_branch
      %988 = sbr.rel (0) target = $region73
    $region72: #{tpu_custom_call.1} parent=1 // pred_region
      %990 = vsyncadd [#allocation4], 0
      %s991 = sshll.u32 [#allocation14], 4
      %s992 = int_to_ptr.vmem [resolvable:$true] %s991
      %s993 = sshll.u32 %s10, 4
      %s994 = int_to_ptr.hbm [resolvable:$true] %s993
      %999 = dma.vmem_to_hbm [thread:$0]  %s992, 128, %s994, [#allocation4], 64, 64, 4
    $region73: #{tpu_custom_call.1} parent=1 // pred_fallthru
      _
    // Predicated region
    $region74: #{tpu_custom_call.1} parent=1 // pred_check
      _
    $region75: #{tpu_custom_call.1} parent=1 // pred_check_branch
      %1001 = sbr.rel (0) target = $region77
    $region76: #{tpu_custom_call.1} parent=1 // pred_region
      %1003 = dma.done [#allocation4], 128
    $region77: #{tpu_custom_call.1} parent=1 // pred_fallthru
      _
    %1004 = vsyncpa [#allocation3], 1
    %1005 = vsyncpa [#allocation6], 1
    %1006 = vsyncpa [#allocation9], 1
    %1007 = vsyncpa [#allocation12], 1
    %1008 = vsyncpa [#allocation4], 1

</llo_original>
